<compile_context>
chip_gen: v7x
topology: tpu7x:2x2x1
jax: 0.10.0
libtpu: 0.0.40
codegen_flags: <defaults>
</compile_context>

<pallas_src>
import numpy as np

import jax
import jax.numpy as jnp
from jax.experimental import pallas as pl
from jax.experimental.pallas import tpu as pltpu

_LANES = 128
_SUBLANES = 8
_MAX_TILE_ROWS = 512


# ----------------------------- Pallas kernels ------------------------------ #

def _weighted_abs_diff_sum_kernel(a_ref, b_ref, w_ref, out_ref, acc_ref):
    """Accumulates w * |a - b| per lane; epilogue reduces sublanes to (1,128)."""
    i = pl.program_id(0)

    @pl.when(i == 0)
    def _():
        acc_ref[...] = jnp.zeros_like(acc_ref)

    acc_ref[...] += w_ref[...] * jnp.abs(a_ref[...] - b_ref[...])

    @pl.when(i == pl.num_programs(0) - 1)
    def _():
        out_ref[...] = jnp.sum(acc_ref[...], axis=0, keepdims=True)


def _weighted_sq_sum_kernel(x_ref, w_ref, out_ref, acc_ref):
    """Accumulates w * x^2 per lane; epilogue reduces sublanes to (1,128)."""
    i = pl.program_id(0)

    @pl.when(i == 0)
    def _():
        acc_ref[...] = jnp.zeros_like(acc_ref)

    x = x_ref[...]
    acc_ref[...] += w_ref[...] * (x * x)

    @pl.when(i == pl.num_programs(0) - 1)
    def _():
        out_ref[...] = jnp.sum(acc_ref[...], axis=0, keepdims=True)


# ------------------------------ glue / wrappers ----------------------------- #

def _cdiv(a, b):
    return -(-a // b)


def _rows_for(n):
    return max(1, _cdiv(n, _LANES))


def _round_rows(r):
    """Total row count: multiple of 8 (small) or of the 512-row tile (large)."""
    if r <= _MAX_TILE_ROWS:
        return _cdiv(r, _SUBLANES) * _SUBLANES
    return _cdiv(r, _MAX_TILE_ROWS) * _MAX_TILE_ROWS


def _build_data_slab(tensors, total_rows):
    """Flatten each tensor to whole zero-padded (rows_i, 128) pieces, concat,
    then zero-pad to (total_rows, 128)."""
    pieces = []
    for t in tensors:
        f = jnp.asarray(t, jnp.float32).reshape(-1)
        n = int(f.shape[0])
        rows = _rows_for(n)
        pad = rows * _LANES - n
        pieces.append(jnp.pad(f, (0, pad)).reshape(rows, _LANES))
    slab = jnp.concatenate(pieces, axis=0) if len(pieces) > 1 else pieces[0]
    r = slab.shape[0]
    if r != total_rows:
        slab = jnp.pad(slab, ((0, total_rows - r), (0, 0)))
    return slab


def _build_weights(sizes, total_rows):
    """Per-row weight 1/n_segment for the rows of each segment, 0 for pad rows."""
    w = np.zeros((total_rows, 1), np.float32)
    row = 0
    for n in sizes:
        rows = _rows_for(n)
        w[row:row + rows, 0] = 1.0 / float(n)
        row += rows
    return jnp.asarray(w)


def _reduce_call(kernel, data_slabs, weights):
    """Single fused weighted-sum reduction over one or two (R,128) slabs."""
    rows = data_slabs[0].shape[0]
    tile = rows if rows <= _MAX_TILE_ROWS else _MAX_TILE_ROWS
    grid = (rows // tile,)

    in_specs = [pl.BlockSpec((tile, _LANES), lambda i: (i, 0)) for _ in data_slabs]
    in_specs.append(pl.BlockSpec((tile, 1), lambda i: (i, 0)))

    out = pl.pallas_call(
        kernel,
        out_shape=jax.ShapeDtypeStruct((1, _LANES), jnp.float32),
        grid_spec=pltpu.PrefetchScalarGridSpec(
            num_scalar_prefetch=0,
            grid=grid,
            in_specs=in_specs,
            out_specs=pl.BlockSpec((1, _LANES), lambda i: (0, 0)),
            scratch_shapes=[pltpu.VMEM((tile, _LANES), jnp.float32)],
        ),
        compiler_params=pltpu.CompilerParams(
            dimension_semantics=("arbitrary",)),
    )(*data_slabs, weights)
    return jnp.sum(out)


def _fused_sum_of_mean_abs_diff(targets, preds):
    """sum_i mean(|targets_i - preds_i|) with a single pallas_call."""
    sizes = [int(np.prod(jnp.shape(t))) for t in targets]
    total_rows = _round_rows(sum(_rows_for(n) for n in sizes))
    a = _build_data_slab(targets, total_rows)
    b = _build_data_slab(preds, total_rows)
    w = _build_weights(sizes, total_rows)
    return _reduce_call(_weighted_abs_diff_sum_kernel, [a, b], w)


def _fused_sum_of_mean_sq(shifted_tensors):
    """sum_i mean(x_i^2) with a single pallas_call (x already shift-subtracted)."""
    sizes = [int(np.prod(jnp.shape(t))) for t in shifted_tensors]
    total_rows = _round_rows(sum(_rows_for(n) for n in sizes))
    x = _build_data_slab(shifted_tensors, total_rows)
    w = _build_weights(sizes, total_rows)
    return _reduce_call(_weighted_sq_sum_kernel, [x], w)


# ------------------------------ module port --------------------------------- #

class HiFiLoss:
    """Pallas port of tts/loss/HifiLoss.py::HiFiLoss (no learnable parameters)."""

    def __init__(self, mel_coeff: float = 45.0, feature_coeff: float = 2.0):
        self.mel_coeff = mel_coeff
        self.feature_coeff = feature_coeff

    def mel_loss(self, target_mels, pred_mels):
        return self.mel_coeff * _fused_sum_of_mean_abs_diff([target_mels],
                                                            [pred_mels])

    @staticmethod
    def discriminator_loss(target_prob, pred_prob):
        # sum_i mean((tg_i - 1)^2) + mean(pr_i^2), fused into ONE kernel call.
        shifted = [jnp.asarray(tg, jnp.float32) - 1.0 for tg in target_prob]
        shifted += [jnp.asarray(pr, jnp.float32) for pr in pred_prob]
        return _fused_sum_of_mean_sq(shifted)

    @staticmethod
    def generator_loss(pred_prob):
        shifted = [jnp.asarray(pr, jnp.float32) - 1.0 for pr in pred_prob]
        return _fused_sum_of_mean_sq(shifted)

    def feature_loss(self, target_prob, pred_prob):
        tg = [t for layers in target_prob for t in layers]
        pr = [p for layers in pred_prob for p in layers]
        return self.feature_coeff * _fused_sum_of_mean_abs_diff(tg, pr)

    def forward(self, x):
        # Matches the PyTorch module: there is no combined loss.
        raise ValueError('Нет общего лосса')

    __call__ = forward


# ------------------------------- reference ---------------------------------- #

def _ref_all(target_mels, pred_mels, tg_probs, pr_probs, tg_feats, pr_feats,
             mel_coeff=45.0, feature_coeff=2.0):
    mel = mel_coeff * jnp.mean(jnp.abs(target_mels - pred_mels))
    disc = sum(jnp.mean((tg - 1.0) ** 2) + jnp.mean(pr ** 2)
               for tg, pr in zip(tg_probs, pr_probs))
    gen = sum(jnp.mean((pr - 1.0) ** 2) for pr in pr_probs)
    feat = feature_coeff * sum(
        jnp.mean(jnp.abs(tg - pr))
        for t_list, p_list in zip(tg_feats, pr_feats)
        for tg, pr in zip(t_list, p_list))
    return mel, disc, gen, feat


if __name__ == "__main__":
    key = jax.random.PRNGKey(0)
    ks = jax.random.split(key, 16)

    # Mel spectrograms: (batch, n_mels, frames)
    target_mels = jax.random.normal(ks[0], (2, 20, 37), jnp.float32)
    pred_mels = jax.random.normal(ks[1], (2, 20, 37), jnp.float32)

    # Discriminator output "probabilities": list of per-scale tensors.
    prob_shapes = [(2, 1, 50), (2, 1, 25), (2, 1, 13)]
    tg_probs = [jax.random.normal(ks[2 + i], s, jnp.float32)
                for i, s in enumerate(prob_shapes)]
    pr_probs = [jax.random.normal(ks[5 + i], s, jnp.float32)
                for i, s in enumerate(prob_shapes)]

    # Feature maps: list (per discriminator) of lists (per layer) of tensors.
    feat_shapes = [[(2, 4, 30), (2, 8, 15)], [(2, 4, 28), (2, 16, 7)]]
    tg_feats = [[jax.random.normal(ks[8 + 2 * d + l], s, jnp.float32)
                 for l, s in enumerate(layers)]
                for d, layers in enumerate(feat_shapes)]
    pr_feats = [[jax.random.normal(ks[12 + 2 * d + l], s, jnp.float32)
                 for l, s in enumerate(layers)]
                for d, layers in enumerate(feat_shapes)]

    loss_mod = HiFiLoss()

    mel = jax.block_until_ready(loss_mod.mel_loss(target_mels, pred_mels))
    disc = jax.block_until_ready(loss_mod.discriminator_loss(tg_probs, pr_probs))
    gen = jax.block_until_ready(loss_mod.generator_loss(pr_probs))
    feat = jax.block_until_ready(loss_mod.feature_loss(tg_feats, pr_feats))

    # forward() has no combined loss in the reference module — verify it raises.
    forward_raised = False
    try:
        loss_mod.forward(target_mels)
    except ValueError:
        forward_raised = True
    assert forward_raised

    mel_r, disc_r, gen_r, feat_r = _ref_all(
        target_mels, pred_mels, tg_probs, pr_probs, tg_feats, pr_feats)

    assert jnp.allclose(mel, mel_r, rtol=1e-5, atol=1e-5), (mel, mel_r)
    assert jnp.allclose(disc, disc_r, rtol=1e-5, atol=1e-5), (disc, disc_r)
    assert jnp.allclose(gen, gen_r, rtol=1e-5, atol=1e-5), (gen, gen_r)
    assert jnp.allclose(feat, feat_r, rtol=1e-5, atol=1e-5), (feat, feat_r)

    print("KERNEL_OK")
</pallas_src>

<mosaic_0001>
module attributes {stable_mosaic.version = 11 : i64} {
  func.func @_weighted_abs_diff_sum_kernel(%arg0: i32, %arg1: memref<16x128xf32, #tpu.memory_space<vmem>>, %arg2: memref<16x128xf32, #tpu.memory_space<vmem>>, %arg3: memref<16x1xf32, #tpu.memory_space<vmem>>, %arg4: memref<1x128xf32, #tpu.memory_space<vmem>>, %arg5: memref<16x128xf32, #tpu.memory_space<vmem>>) attributes {dimension_semantics = [#tpu.dimension_semantics<arbitrary>], iteration_bounds = array<i64: 1>, scalar_prefetch = 0 : i64, scratch_operands = 1 : i64, tpu.core_type = #tpu.core_type<tc>, window_params = [{transform_indices = @transform_0, window_bounds = array<i64: 16, 128>}, {transform_indices = @transform_1, window_bounds = array<i64: 16, 128>}, {transform_indices = @transform_2, window_bounds = array<i64: 16, 1>}, {pipeline_mode = #tpu.pipeline_mode<synchronous>, transform_indices = @transform_3, window_bounds = array<i64: 1, 128>}]} {
    %c0_i32 = arith.constant 0 : i32
    %0 = arith.cmpi eq, %arg0, %c0_i32 : i32
    %1 = arith.extui %0 : i1 to i32
    %c0_i32_0 = arith.constant 0 : i32
    %2 = arith.cmpi ne, %1, %c0_i32_0 : i32
    scf.if %2 {
      %cst = arith.constant 0.000000e+00 : f32
      %16 = vector.broadcast %cst : f32 to vector<16x128xf32>
      %c0_12 = arith.constant 0 : index
      %c0_13 = arith.constant 0 : index
      %17 = vector.load %arg5[%c0_12, %c0_13] : memref<16x128xf32, #tpu.memory_space<vmem>>, vector<16x128xf32>
      tpu.vector_store %arg5[%c0_12, %c0_13], %16 {strides = array<i32>} : memref<16x128xf32, #tpu.memory_space<vmem>>, vector<16x128xf32>,
    } else {
    }
    %c0 = arith.constant 0 : index
    %c0_1 = arith.constant 0 : index
    %3 = vector.load %arg5[%c0, %c0_1] : memref<16x128xf32, #tpu.memory_space<vmem>>, vector<16x128xf32>
    %c0_2 = arith.constant 0 : index
    %c0_3 = arith.constant 0 : index
    %4 = vector.load %arg3[%c0_2, %c0_3] : memref<16x1xf32, #tpu.memory_space<vmem>>, vector<16x1xf32>
    %c0_4 = arith.constant 0 : index
    %c0_5 = arith.constant 0 : index
    %5 = vector.load %arg1[%c0_4, %c0_5] : memref<16x128xf32, #tpu.memory_space<vmem>>, vector<16x128xf32>
    %c0_6 = arith.constant 0 : index
    %c0_7 = arith.constant 0 : index
    %6 = vector.load %arg2[%c0_6, %c0_7] : memref<16x128xf32, #tpu.memory_space<vmem>>, vector<16x128xf32>
    %7 = arith.subf %5, %6 : vector<16x128xf32>
    %8 = math.absf %7 : vector<16x128xf32>
    %9 = vector.broadcast %4 : vector<16x1xf32> to vector<16x128xf32>
    %10 = arith.mulf %9, %8 : vector<16x128xf32>
    %11 = arith.addf %3, %10 : vector<16x128xf32>
    %c0_8 = arith.constant 0 : index
    %c0_9 = arith.constant 0 : index
    %12 = vector.load %arg5[%c0_8, %c0_9] : memref<16x128xf32, #tpu.memory_space<vmem>>, vector<16x128xf32>
    tpu.vector_store %arg5[%c0_8, %c0_9], %11 {strides = array<i32>} : memref<16x128xf32, #tpu.memory_space<vmem>>, vector<16x128xf32>,
    %c0_i32_10 = arith.constant 0 : i32
    %13 = arith.cmpi eq, %arg0, %c0_i32_10 : i32
    %14 = arith.extui %13 : i1 to i32
    %c0_i32_11 = arith.constant 0 : i32
    %15 = arith.cmpi ne, %14, %c0_i32_11 : i32
    scf.if %15 {
      %c0_12 = arith.constant 0 : index
      %c0_13 = arith.constant 0 : index
      %16 = vector.load %arg5[%c0_12, %c0_13] : memref<16x128xf32, #tpu.memory_space<vmem>>, vector<16x128xf32>
      %cst = arith.constant dense<0.000000e+00> : vector<128xf32>
      %17 = vector.multi_reduction <add>, %16, %cst [0] : vector<16x128xf32> to vector<128xf32>
      %18 = vector.shape_cast %17 : vector<128xf32> to vector<1x128xf32>
      %c0_14 = arith.constant 0 : index
      %c0_15 = arith.constant 0 : index
      %19 = vector.load %arg4[%c0_14, %c0_15] : memref<1x128xf32, #tpu.memory_space<vmem>>, vector<1x128xf32>
      tpu.vector_store %arg4[%c0_14, %c0_15], %18 {strides = array<i32>} : memref<1x128xf32, #tpu.memory_space<vmem>>, vector<1x128xf32>,
    } else {
    }
    return
  }
  func.func @transform_0(%arg0: i32) -> (i32, i32) {
    %c0_i32 = arith.constant 0 : i32
    %c0_i32_0 = arith.constant 0 : i32
    return %arg0, %c0_i32 : i32, i32
  }
  func.func @transform_1(%arg0: i32) -> (i32, i32) {
    %c0_i32 = arith.constant 0 : i32
    %c0_i32_0 = arith.constant 0 : i32
    return %arg0, %c0_i32 : i32, i32
  }
  func.func @transform_2(%arg0: i32) -> (i32, i32) {
    %c0_i32 = arith.constant 0 : i32
    %c0_i32_0 = arith.constant 0 : i32
    return %arg0, %c0_i32 : i32, i32
  }
  func.func @transform_3(%arg0: i32) -> (i32, i32) {
    %c0_i32 = arith.constant 0 : i32
    %c0_i32_0 = arith.constant 0 : i32
    %c0_i32_1 = arith.constant 0 : i32
    return %c0_i32, %c0_i32_0 : i32, i32
  }
}

</mosaic_0001>

<llo_original>
// kernel: tpu_custom_call.1
$region0: #{tpu_custom_call.1}
  #allocation0 [shape = 'u32[]', space=smem, size = 0x4, offset = 0x4, fixed_abs, tag = 'smem constant byte address 0x4 - core index']
  #allocation1 [shape = 'u32[144,128]{1,0:T(1,128)}', space=vmem, size = 0x12000, scoped, tag = 'internal scratch']
  #allocation2 [shape = 'f32[16,128]{1,0:T(8,128)}', space=vmem, size = 0x2000, scoped, tag = 'scratch operand']
  %s0 = inlined_call_operand.vmem [shape: f32[16,128], index: 0, kind: input, shape index: {}]
  %s1 = inlined_call_operand.hbm [shape: f32[16,128], index: 1, kind: input, shape index: {}]
  %s2 = inlined_call_operand.vmem [shape: f32[16,1], index: 2, kind: input, shape index: {}]
  %s3 = inlined_call_operand.hbm [shape: f32[1,128], index: 3, kind: output, shape index: {}]
  %s4 = sld [smem:[#allocation0]]
  $region34: #{tpu_custom_call.1} parent=0
    _
  %s6 = ssub.s32 1, %s4
  %s7 = scalar_select 0, %s6, %s4
  $region1: #{tpu_custom_call.1} parent=0
    #allocation3 [shape = 'u8[8192]{0}', space=vmem, size = 0x2000, scoped, tag = 'input window, operand 1, single buffered']
    #allocation4 [shape = 's32[1]{0}', space=sflag, size = 0x4, scoped, tag = 'scoped memory for tpu_custom_call.1']
    #allocation5 [shape = 's32[1]{0}', space=sflag, size = 0x4, scoped, tag = 'scoped memory for tpu_custom_call.1']
    #allocation6 [shape = 'u8[512]{0}', space=vmem, size = 0x400, scoped, tag = 'output window, operand 0, single buffered']
    %8 = vsyncpa [#allocation4], 0
    %9 = vsyncpa [#allocation5], 0
    // Predicated region
    $region2: #{tpu_custom_call.1} parent=1 // pred_check
      _
    $region3: #{tpu_custom_call.1} parent=1 // pred_check_branch
      %11 = sbr.rel (0) target = $region5
    $region4: #{tpu_custom_call.1} parent=1 // pred_region
      _
    $region5: #{tpu_custom_call.1} parent=1 // pred_fallthru
      _
    // Predicated region
    $region6: #{tpu_custom_call.1} parent=1 // pred_check
      _
    $region7: #{tpu_custom_call.1} parent=1 // pred_check_branch
      %13 = sbr.rel (0) target = $region9
    $region8: #{tpu_custom_call.1} parent=1 // pred_region
      %s15 = ssub.s32 256, 256
      %16 = vsyncadd [#allocation4], %s15
      %s17 = sshll.u32 [#allocation3], 4
      %s18 = int_to_ptr.vmem [resolvable:$true] %s17
      %23 = dma.hbm_to_vmem [thread:$0]  %s1, 256, %s18, [#allocation4], 128, 128, 8
    $region9: #{tpu_custom_call.1} parent=1 // pred_fallthru
      _
    // Predicated region
    $region10: #{tpu_custom_call.1} parent=1 // pred_check
      _
    $region11: #{tpu_custom_call.1} parent=1 // pred_check_branch
      %25 = sbr.rel (0) target = $region13
    $region12: #{tpu_custom_call.1} parent=1 // pred_region
      _
    $region13: #{tpu_custom_call.1} parent=1 // pred_fallthru
      _
    // Predicated region
    $region14: #{tpu_custom_call.1} parent=1 // pred_check
      _
    $region15: #{tpu_custom_call.1} parent=1 // pred_check_branch
      %27 = sbr.rel (0) target = $region17
    $region16: #{tpu_custom_call.1} parent=1 // pred_region
      %28 = dma.done [#allocation4], 256
    $region17: #{tpu_custom_call.1} parent=1 // pred_fallthru
      _
    %p29 = scmp.eq.s32.totalorder 0, 0
    // Predicated region
    $region18: #{tpu_custom_call.1} parent=1 // pred_check
      %p30 = pneg %p29
    $region19: #{tpu_custom_call.1} parent=1 // pred_check_branch
      %32 = sbr.rel (%p30) target = $region21
    $region20: #{tpu_custom_call.1} parent=1 // pred_region
      %33 = vst [vmem:[#allocation2] sm:$0xff] 0.0
      %34 = vst [vmem:[#allocation2 + $0x8] sm:$0xff] 0.0
    $region21: #{tpu_custom_call.1} parent=1 // pred_fallthru
      _
    %v35 = vld [vmem:[#allocation2] sm:$0xff]
    %v36 = vld [vmem:[#allocation2 + $0x8] sm:$0xff]
    %v37 = vld [vmem:[%s2] sm:$0xff]
    %v38 = vld [vmem:[%s2 + $0x8] sm:$0xff]
    %v39 = vld [vmem:[%s0] sm:$0xff]
    %v40 = vld [vmem:[%s0 + $0x8] sm:$0xff]
    %v41 = vld [vmem:[#allocation3] sm:$0xff]
    %v42 = vld [vmem:[#allocation3 + $0x8] sm:$0xff]
    %v43 = vsub.f32 %v39, %v41
    %v44 = vsub.f32 %v40, %v42
    %v45 = vand.u32 2147483647, %v43
    %v46 = vand.u32 2147483647, %v44
    %48 = vset.pattern.permute.xlu0 0
    %49 = vperm.xlu0 %48, %v37
    %v50 = vpop.permute.xlu0 %49
    %53 = vset.pattern.permute.xlu0 0
    %54 = vperm.xlu0 %53, %v38
    %v55 = vpop.permute.xlu0 %54
    %v57 = vmul.f32 %v50, %v45
    %v58 = vmul.f32 %v55, %v46
    %v59 = vadd.f32 %v35, %v57
    %v60 = vadd.f32 %v36, %v58
    %61 = vst [vmem:[#allocation2] sm:$0xff] %v59
    %62 = vst [vmem:[#allocation2 + $0x8] sm:$0xff] %v60
    // Predicated region
    $region22: #{tpu_custom_call.1} parent=1 // pred_check
      %p63 = pneg %p29
    $region23: #{tpu_custom_call.1} parent=1 // pred_check_branch
      %65 = sbr.rel (%p63) target = $region25
    $region24: #{tpu_custom_call.1} parent=1 // pred_region
      %v66 = vld [vmem:[#allocation2] sm:$0xff]
      %v67 = vld [vmem:[#allocation2 + $0x8] sm:$0xff]
      %v68 = vadd.f32 %v66, %v67
      %v69 = vrot.slane %v68, 4
      %v70 = vadd.f32 %v68, %v69
      %v71 = vrot.slane %v70, 2
      %v72 = vadd.f32 %v70, %v71
      %v73 = vrot.slane %v72, 1
      %v74 = vadd.f32 %v72, %v73
      %75 = vst [vmem:[#allocation6] sm:$0x1] %v74
    $region25: #{tpu_custom_call.1} parent=1 // pred_fallthru
      _
    // Predicated region
    $region26: #{tpu_custom_call.1} parent=1 // pred_check
      _
    $region27: #{tpu_custom_call.1} parent=1 // pred_check_branch
      %77 = sbr.rel (0) target = $region29
    $region28: #{tpu_custom_call.1} parent=1 // pred_region
      %s79 = ssub.s32 16, 16
      %80 = vsyncadd [#allocation5], %s79
      %s82 = sshll.u32 [#allocation6], 4
      %s83 = int_to_ptr.vmem [resolvable:$true] %s82
      %85 = dma.vmem_to_hbm [thread:$0]  %s83, 16, %s3, [#allocation5]
    $region29: #{tpu_custom_call.1} parent=1 // pred_fallthru
      _
    // Predicated region
    $region30: #{tpu_custom_call.1} parent=1 // pred_check
      _
    $region31: #{tpu_custom_call.1} parent=1 // pred_check_branch
      %87 = sbr.rel (0) target = $region33
    $region32: #{tpu_custom_call.1} parent=1 // pred_region
      %88 = dma.done [#allocation5], 16
    $region33: #{tpu_custom_call.1} parent=1 // pred_fallthru
      _
    %89 = vsyncpa [#allocation4], 1
    %90 = vsyncpa [#allocation5], 1

</llo_original>
